<compile_context>
chip_gen: v7x
topology: tpu7x:2x2x1
jax: 0.10.0
libtpu: 0.0.40
codegen_flags: <defaults>
</compile_context>

<pallas_src>
import math

import numpy as np
import jax
import jax.numpy as jnp
from jax.experimental import pallas as pl
from jax.experimental.pallas import tpu as pltpu

NUM_A = 3  # number of adjacency matrices (A has shape (NUM_A, V, V))


def st_residual_kernel(x_ref, Abd_ref, Wf_ref, b1_ref,
                       Wt_ref, b2_ref, Wd_ref, bd_ref, o_ref, xa_ref):
    """One grid step processes a (NB, Cin, LT) activation slab (NB whole batch elements)."""
    nb, cin, _ = x_ref.shape
    for b in range(nb):                          # static unroll over batch elems in this block
        x = x_ref[b].astype(jnp.bfloat16)        # (Cin, LT) bf16 MXU operand

        # Spatial graph conv (bn1 folded into Wf).  The xa_i = x @ kron(I, A_i) are stacked
        # along the K (sublane) axis in a small VMEM scratch so the NUM_A branch sum collapses
        # into ONE (Cout, NUM_A*Cin) @ (NUM_A*Cin, LT) MXU matmul.
        for i in range(NUM_A):
            xa_ref[i * cin:(i + 1) * cin, :] = jnp.dot(
                x, Abd_ref[i], preferred_element_type=jnp.float32)
        xa = xa_ref[...].astype(jnp.bfloat16)    # (NUM_A*Cin, LT)

        y = jnp.dot(Wf_ref[...], xa, preferred_element_type=jnp.float32) + b1_ref[...]
        y = jnp.maximum(y, 0.0)                  # relu; dropout == identity in eval mode

        # Temporal conv (k=1, stride=1 -> pointwise) with bn2 folded; relu.
        y = jnp.dot(Wt_ref[...], y.astype(jnp.bfloat16),
                    preferred_element_type=jnp.float32) + b2_ref[...]
        y = jnp.maximum(y, 0.0)

        # Downsample residual: 1x1 conv (bias=False) with its BN folded.
        r = jnp.dot(Wd_ref[...], x, preferred_element_type=jnp.float32) + bd_ref[...]

        # out += residual ; relu
        o_ref[b] = jnp.maximum(y + r, 0.0).astype(o_ref.dtype)


def _pick_lane_tile(L, V, max_kron_bytes=4 << 20):
    """Smallest lane tile LT that divides L, is a multiple of V (kron block alignment) and is
    lane-dense (multiple of 128, or the full L).  Kept MINIMAL: the graph-conv matmul
    x @ kron(I, A) wastes LT/V x FLOPs and (LT/V)^2 x Abd bytes, so never grow LT."""
    lcm = V * 128 // math.gcd(V, 128)
    lt = lcm if (L % lcm == 0) else L            # fall back to one full-width tile
    if NUM_A * lt * lt * 2 > max_kron_bytes:     # bf16 Abd budget
        # TODO(synk): V that does not tile into multiples of 128 (e.g. V=25 at large T) needs a
        # different graph-conv layout than kron(I, A); guard instead of blowing VMEM.
        raise NotImplementedError(
            f"block-diagonal adjacency for LT={lt} needs {NUM_A * lt * lt * 2} bytes of VMEM")
    return lt


def _pick_batch_split(N, bytes_per_sample, min_parallel=2, vmem_budget=8 << 20):
    """Smallest grid split G (dividing N) with at least `min_parallel` steps (feeds both v7x
    TensorCores; the extra ~0.35us step is noise on 1-TC v5e/v6e) whose per-step,
    double-buffered activation block stays comfortably inside scoped VMEM."""
    for g in range(1, N + 1):
        if N % g:
            continue
        if g < min_parallel and g < N:
            continue
        if (N // g) * bytes_per_sample * 2 <= vmem_budget:
            return g
    return N


def st_residual_unit(x_nchw, P):
    """x_nchw: (N, C, T, V), P: dict of parameters. Returns (N, Cout, T, V) in x's dtype."""
    N, C, T, V = x_nchw.shape
    Cout = P['Wt'].shape[0]
    L = T * V
    LT = _pick_lane_tile(L, V)

    # Free, contiguous reshape (no transpose): lane axis becomes T*V.
    x = x_nchw.reshape(N, C, L)

    # Fold BN affines into conv weights / biases once (outside the kernel); cast every MXU
    # weight operand to bf16, keep biases f32 (f32 accumulators in the kernel).
    Wf = P['bn1s'][None, :, :] * P['Ws']                            # (NUM_A, Cout, Cin)
    Wf = jnp.transpose(Wf, (1, 0, 2)).reshape(Cout, NUM_A * C)      # matches K-stacked xa
    Wf = Wf.astype(jnp.bfloat16)
    b1 = (P['bn1s'] * P['bsum'] + P['bn1b']).astype(jnp.float32)    # (Cout, 1)
    Wt = (P['bn2s'] * P['Wt']).astype(jnp.bfloat16)                 # (Cout, Cout)
    b2 = (P['bn2s'] * P['bt'] + P['bn2b']).astype(jnp.float32)      # (Cout, 1)
    Wd = (P['bnds'] * P['Wd']).astype(jnp.bfloat16)                 # (Cout, Cin)
    bd = P['bndb'].astype(jnp.float32)                              # (Cout, 1)

    # Block-diagonal adjacency over one lane tile: kron(I_{LT/V}, A_i).  The same (LT, LT)
    # block serves every lane tile, so one (bf16) copy lives in VMEM for the whole kernel.
    eye = jnp.eye(LT // V, dtype=jnp.float32)
    Abd = jnp.stack([jnp.kron(eye, P['A'][i].astype(jnp.float32))
                     for i in range(NUM_A)]).astype(jnp.bfloat16)   # (NUM_A, LT, LT)

    # Grid: at most a few 'parallel' steps over the batch; lane axis only if L > one tile.
    itemsize = x.dtype.itemsize
    G = _pick_batch_split(N, (C + Cout) * L * itemsize)
    NB = N // G
    grid = (G, L // LT)

    # Advisory cost estimate so XLA schedules neighbors around the custom call sensibly.
    flops = 2 * N * L * (NUM_A * C * LT + Cout * NUM_A * C + Cout * Cout + Cout * C)
    bytes_accessed = (x.size * itemsize + N * Cout * L * itemsize
                      + 2 * (Abd.size + Wf.size + Wt.size + Wd.size)
                      + 4 * (b1.size + b2.size + bd.size))

    def full_spec(a):
        nd = a.ndim
        return pl.BlockSpec(a.shape, lambda n, j, _nd=nd: (0,) * _nd)

    out = pl.pallas_call(
        st_residual_kernel,
        out_shape=jax.ShapeDtypeStruct((N, Cout, L), x_nchw.dtype),
        grid=grid,
        in_specs=[
            pl.BlockSpec((NB, C, LT), lambda n, j: (n, 0, j)),
            full_spec(Abd), full_spec(Wf), full_spec(b1),
            full_spec(Wt), full_spec(b2), full_spec(Wd), full_spec(bd),
        ],
        out_specs=pl.BlockSpec((NB, Cout, LT), lambda n, j: (n, 0, j)),
        scratch_shapes=[pltpu.VMEM((NUM_A * C, LT), jnp.float32)],   # K-stacked xa
        compiler_params=pltpu.CompilerParams(
            dimension_semantics=("parallel", "parallel")),
        cost_estimate=pl.CostEstimate(flops=int(flops), transcendentals=0,
                                      bytes_accessed=int(bytes_accessed)),
    )(x, Abd, Wf, b1, Wt, b2, Wd, bd)

    return out.reshape(N, Cout, T, V)


def fold_bn(gamma, beta, mean, var, eps=1e-5):
    scale = gamma / jnp.sqrt(var + eps)
    shift = beta - mean * scale
    return scale.reshape(-1, 1), shift.reshape(-1, 1)


def reference_nchw(x, P):
    """Plain-JAX f32 reference mirroring the PyTorch forward (eval mode), no folding."""
    N, C, T, V = x.shape
    y = None
    for i in range(NUM_A):
        xa = (x.reshape(-1, V) @ P['A'][i]).reshape(N, C, T, V)
        yi = jnp.einsum('oc,nctv->notv', P['Ws'][i], xa)
        y = yi if y is None else y + yi
    y = y + P['bsum'].reshape(1, -1, 1, 1)
    y = jnp.maximum(y * P['bn1s'].reshape(1, -1, 1, 1) + P['bn1b'].reshape(1, -1, 1, 1), 0.)
    y = jnp.einsum('oc,nctv->notv', P['Wt'], y) + P['bt'].reshape(1, -1, 1, 1)
    y = jnp.maximum(y * P['bn2s'].reshape(1, -1, 1, 1) + P['bn2b'].reshape(1, -1, 1, 1), 0.)
    r = jnp.einsum('oc,nctv->notv', P['Wd'], x)
    r = r * P['bnds'].reshape(1, -1, 1, 1) + P['bndb'].reshape(1, -1, 1, 1)
    return jnp.maximum(y + r, 0.)


if __name__ == "__main__":
    N, Cin, Cout, T, V = 2, 4, 8, 8, 16

    key = jax.random.PRNGKey(0)
    ks = jax.random.split(key, 16)

    x = jax.random.normal(ks[0], (N, Cin, T, V), dtype=jnp.float32)

    # Graph adjacency (NUM_A, V, V): identity-ish plus noise, deterministic.
    A = jnp.eye(V, dtype=jnp.float32)[None] + 0.1 * jax.random.normal(ks[1], (NUM_A, V, V))

    # Spatial 1x1 convs (He-style scaled normal init) and biases.
    Ws = jax.random.normal(ks[2], (NUM_A, Cout, Cin)) * (2.0 / Cin) ** 0.5
    bs = 0.1 * jax.random.normal(ks[3], (NUM_A, Cout))
    bsum = jnp.sum(bs, axis=0).reshape(-1, 1)          # conv biases add up across branches

    # bn1 (running stats folded into affine)
    bn1s, bn1b = fold_bn(1.0 + 0.1 * jax.random.normal(ks[4], (Cout,)),
                         0.1 * jax.random.normal(ks[5], (Cout,)),
                         0.1 * jax.random.normal(ks[6], (Cout,)),
                         jnp.abs(jax.random.normal(ks[7], (Cout,))) + 0.5)

    # temporal 1x1 conv
    Wt = jax.random.normal(ks[8], (Cout, Cout)) * (2.0 / Cout) ** 0.5
    bt = 0.1 * jax.random.normal(ks[9], (Cout,)).reshape(-1, 1)

    # bn2
    bn2s, bn2b = fold_bn(1.0 + 0.1 * jax.random.normal(ks[10], (Cout,)),
                         0.1 * jax.random.normal(ks[11], (Cout,)),
                         0.1 * jax.random.normal(ks[12], (Cout,)),
                         jnp.abs(jax.random.normal(ks[13], (Cout,))) + 0.5)

    # downsample: 1x1 conv (no bias) + bn
    Wd = jax.random.normal(ks[14], (Cout, Cin)) * (2.0 / Cin) ** 0.5
    bnds, bndb = fold_bn(jnp.ones((Cout,)), jnp.zeros((Cout,)),
                         0.1 * jax.random.normal(ks[15], (Cout,)),
                         jnp.ones((Cout,)))

    P = dict(A=A, Ws=Ws, bsum=bsum, bn1s=bn1s, bn1b=bn1b, Wt=Wt, bt=bt,
             bn2s=bn2s, bn2b=bn2b, Wd=Wd, bnds=bnds, bndb=bndb)

    out = st_residual_unit(x, P)
    out = jax.block_until_ready(out)

    ref = reference_nchw(x, P)
    # Tolerance loosened from the f32 1e-4: the kernel feeds the MXU bf16 operands (with f32
    # accumulation and f32 biases) per the performance review.
    np.testing.assert_allclose(np.asarray(out), np.asarray(ref), rtol=5e-2, atol=1.5e-1)

    print("KERNEL_OK")
</pallas_src>

<mosaic_0001>
module attributes {stable_mosaic.version = 11 : i64} {
  func.func @st_residual_kernel(%arg0: i32, %arg1: i32, %arg2: memref<1x4x128xf32, #tpu.memory_space<vmem>>, %arg3: memref<3x128x128xbf16, #tpu.memory_space<vmem>>, %arg4: memref<8x12xbf16, #tpu.memory_space<vmem>>, %arg5: memref<8x1xf32, #tpu.memory_space<vmem>>, %arg6: memref<8x8xbf16, #tpu.memory_space<vmem>>, %arg7: memref<8x1xf32, #tpu.memory_space<vmem>>, %arg8: memref<8x4xbf16, #tpu.memory_space<vmem>>, %arg9: memref<8x1xf32, #tpu.memory_space<vmem>>, %arg10: memref<1x8x128xf32, #tpu.memory_space<vmem>>, %arg11: memref<12x128xf32, #tpu.memory_space<vmem>>) attributes {dimension_semantics = [#tpu.dimension_semantics<parallel>, #tpu.dimension_semantics<parallel>], iteration_bounds = array<i64: 2, 1>, scalar_prefetch = 0 : i64, scratch_operands = 1 : i64, tpu.core_type = #tpu.core_type<tc>, window_params = [{transform_indices = @transform_0, window_bounds = array<i64: 1, 4, 128>}, {pipeline_mode = #tpu.pipeline_mode<synchronous>, transform_indices = @transform_1, window_bounds = array<i64: 3, 128, 128>}, {pipeline_mode = #tpu.pipeline_mode<synchronous>, transform_indices = @transform_2, window_bounds = array<i64: 8, 12>}, {pipeline_mode = #tpu.pipeline_mode<synchronous>, transform_indices = @transform_3, window_bounds = array<i64: 8, 1>}, {pipeline_mode = #tpu.pipeline_mode<synchronous>, transform_indices = @transform_4, window_bounds = array<i64: 8, 8>}, {pipeline_mode = #tpu.pipeline_mode<synchronous>, transform_indices = @transform_5, window_bounds = array<i64: 8, 1>}, {pipeline_mode = #tpu.pipeline_mode<synchronous>, transform_indices = @transform_6, window_bounds = array<i64: 8, 4>}, {pipeline_mode = #tpu.pipeline_mode<synchronous>, transform_indices = @transform_7, window_bounds = array<i64: 8, 1>}, {transform_indices = @transform_8, window_bounds = array<i64: 1, 8, 128>}]} {
    %c0 = arith.constant 0 : index
    %c0_0 = arith.constant 0 : index
    %c0_1 = arith.constant 0 : index
    %0 = vector.load %arg2[%c0, %c0_0, %c0_1] : memref<1x4x128xf32, #tpu.memory_space<vmem>>, vector<1x4x128xf32>
    %1 = vector.shape_cast %0 : vector<1x4x128xf32> to vector<4x128xf32>
    %2 = arith.truncf %1 : vector<4x128xf32> to vector<4x128xbf16>
    %c0_2 = arith.constant 0 : index
    %c0_3 = arith.constant 0 : index
    %c0_4 = arith.constant 0 : index
    %3 = vector.load %arg3[%c0_2, %c0_3, %c0_4] : memref<3x128x128xbf16, #tpu.memory_space<vmem>>, vector<1x128x128xbf16>
    %4 = vector.shape_cast %3 : vector<1x128x128xbf16> to vector<128x128xbf16>
    %cst = arith.constant dense<0.000000e+00> : vector<4x128xf32>
    %5 = tpu.matmul %2, %4, %cst {dimension_numbers = #tpu.dot_dimension_numbers<[1], [0], [0], [1], [0, 0, 1, 1], [], []>} : vector<4x128xbf16>, vector<128x128xbf16>, vector<4x128xf32> -> vector<4x128xf32>
    %c0_5 = arith.constant 0 : index
    %c0_6 = arith.constant 0 : index
    %6 = vector.load %arg11[%c0_5, %c0_6] : memref<12x128xf32, #tpu.memory_space<vmem>>, vector<4x128xf32>
    tpu.vector_store %arg11[%c0_5, %c0_6], %5 {strides = array<i32>} : memref<12x128xf32, #tpu.memory_space<vmem>>, vector<4x128xf32>,
    %c1 = arith.constant 1 : index
    %c0_7 = arith.constant 0 : index
    %c0_8 = arith.constant 0 : index
    %7 = vector.load %arg3[%c1, %c0_7, %c0_8] : memref<3x128x128xbf16, #tpu.memory_space<vmem>>, vector<1x128x128xbf16>
    %8 = vector.shape_cast %7 : vector<1x128x128xbf16> to vector<128x128xbf16>
    %cst_9 = arith.constant dense<0.000000e+00> : vector<4x128xf32>
    %9 = tpu.matmul %2, %8, %cst_9 {dimension_numbers = #tpu.dot_dimension_numbers<[1], [0], [0], [1], [0, 0, 1, 1], [], []>} : vector<4x128xbf16>, vector<128x128xbf16>, vector<4x128xf32> -> vector<4x128xf32>
    %c4 = arith.constant 4 : index
    %c0_10 = arith.constant 0 : index
    %10 = vector.load %arg11[%c4, %c0_10] : memref<12x128xf32, #tpu.memory_space<vmem>>, vector<4x128xf32>
    tpu.vector_store %arg11[%c4, %c0_10], %9 {strides = array<i32>} : memref<12x128xf32, #tpu.memory_space<vmem>>, vector<4x128xf32>,
    %c2 = arith.constant 2 : index
    %c0_11 = arith.constant 0 : index
    %c0_12 = arith.constant 0 : index
    %11 = vector.load %arg3[%c2, %c0_11, %c0_12] : memref<3x128x128xbf16, #tpu.memory_space<vmem>>, vector<1x128x128xbf16>
    %12 = vector.shape_cast %11 : vector<1x128x128xbf16> to vector<128x128xbf16>
    %cst_13 = arith.constant dense<0.000000e+00> : vector<4x128xf32>
    %13 = tpu.matmul %2, %12, %cst_13 {dimension_numbers = #tpu.dot_dimension_numbers<[1], [0], [0], [1], [0, 0, 1, 1], [], []>} : vector<4x128xbf16>, vector<128x128xbf16>, vector<4x128xf32> -> vector<4x128xf32>
    %c8 = arith.constant 8 : index
    %c0_14 = arith.constant 0 : index
    %14 = vector.load %arg11[%c8, %c0_14] : memref<12x128xf32, #tpu.memory_space<vmem>>, vector<4x128xf32>
    tpu.vector_store %arg11[%c8, %c0_14], %13 {strides = array<i32>} : memref<12x128xf32, #tpu.memory_space<vmem>>, vector<4x128xf32>,
    %c0_15 = arith.constant 0 : index
    %c0_16 = arith.constant 0 : index
    %15 = vector.load %arg11[%c0_15, %c0_16] : memref<12x128xf32, #tpu.memory_space<vmem>>, vector<12x128xf32>
    %16 = arith.truncf %15 : vector<12x128xf32> to vector<12x128xbf16>
    %c0_17 = arith.constant 0 : index
    %c0_18 = arith.constant 0 : index
    %17 = vector.load %arg4[%c0_17, %c0_18] : memref<8x12xbf16, #tpu.memory_space<vmem>>, vector<8x12xbf16>
    %cst_19 = arith.constant dense<0.000000e+00> : vector<8x128xf32>
    %18 = tpu.matmul %17, %16, %cst_19 {dimension_numbers = #tpu.dot_dimension_numbers<[1], [0], [0], [1], [0, 0, 1, 1], [], []>} : vector<8x12xbf16>, vector<12x128xbf16>, vector<8x128xf32> -> vector<8x128xf32>
    %c0_20 = arith.constant 0 : index
    %c0_21 = arith.constant 0 : index
    %19 = vector.load %arg5[%c0_20, %c0_21] : memref<8x1xf32, #tpu.memory_space<vmem>>, vector<8x1xf32>
    %20 = vector.broadcast %19 : vector<8x1xf32> to vector<8x128xf32>
    %21 = arith.addf %18, %20 : vector<8x128xf32>
    %cst_22 = arith.constant 0.000000e+00 : f32
    %22 = vector.broadcast %cst_22 : f32 to vector<8x128xf32>
    %23 = arith.maximumf %21, %22 : vector<8x128xf32>
    %c0_23 = arith.constant 0 : index
    %c0_24 = arith.constant 0 : index
    %24 = vector.load %arg6[%c0_23, %c0_24] : memref<8x8xbf16, #tpu.memory_space<vmem>>, vector<8x8xbf16>
    %25 = arith.truncf %23 : vector<8x128xf32> to vector<8x128xbf16>
    %cst_25 = arith.constant dense<0.000000e+00> : vector<8x128xf32>
    %26 = tpu.matmul %24, %25, %cst_25 {dimension_numbers = #tpu.dot_dimension_numbers<[1], [0], [0], [1], [0, 0, 1, 1], [], []>} : vector<8x8xbf16>, vector<8x128xbf16>, vector<8x128xf32> -> vector<8x128xf32>
    %c0_26 = arith.constant 0 : index
    %c0_27 = arith.constant 0 : index
    %27 = vector.load %arg7[%c0_26, %c0_27] : memref<8x1xf32, #tpu.memory_space<vmem>>, vector<8x1xf32>
    %28 = vector.broadcast %27 : vector<8x1xf32> to vector<8x128xf32>
    %29 = arith.addf %26, %28 : vector<8x128xf32>
    %cst_28 = arith.constant 0.000000e+00 : f32
    %30 = vector.broadcast %cst_28 : f32 to vector<8x128xf32>
    %31 = arith.maximumf %29, %30 : vector<8x128xf32>
    %c0_29 = arith.constant 0 : index
    %c0_30 = arith.constant 0 : index
    %32 = vector.load %arg8[%c0_29, %c0_30] : memref<8x4xbf16, #tpu.memory_space<vmem>>, vector<8x4xbf16>
    %cst_31 = arith.constant dense<0.000000e+00> : vector<8x128xf32>
    %33 = tpu.matmul %32, %2, %cst_31 {dimension_numbers = #tpu.dot_dimension_numbers<[1], [0], [0], [1], [0, 0, 1, 1], [], []>} : vector<8x4xbf16>, vector<4x128xbf16>, vector<8x128xf32> -> vector<8x128xf32>
    %c0_32 = arith.constant 0 : index
    %c0_33 = arith.constant 0 : index
    %34 = vector.load %arg9[%c0_32, %c0_33] : memref<8x1xf32, #tpu.memory_space<vmem>>, vector<8x1xf32>
    %35 = vector.broadcast %34 : vector<8x1xf32> to vector<8x128xf32>
    %36 = arith.addf %33, %35 : vector<8x128xf32>
    %37 = arith.addf %31, %36 : vector<8x128xf32>
    %cst_34 = arith.constant 0.000000e+00 : f32
    %38 = vector.broadcast %cst_34 : f32 to vector<8x128xf32>
    %39 = arith.maximumf %37, %38 : vector<8x128xf32>
    %c0_35 = arith.constant 0 : index
    %c0_36 = arith.constant 0 : index
    %c0_37 = arith.constant 0 : index
    %40 = vector.load %arg10[%c0_35, %c0_36, %c0_37] : memref<1x8x128xf32, #tpu.memory_space<vmem>>, vector<1x8x128xf32>
    %41 = vector.shape_cast %40 : vector<1x8x128xf32> to vector<8x128xf32>
    %42 = vector.shape_cast %39 : vector<8x128xf32> to vector<1x8x128xf32>
    tpu.vector_store %arg10[%c0_35, %c0_36, %c0_37], %42 {strides = array<i32>} : memref<1x8x128xf32, #tpu.memory_space<vmem>>, vector<1x8x128xf32>,
    return
  }
  func.func @transform_0(%arg0: i32, %arg1: i32) -> (i32, i32, i32) {
    %c0_i32 = arith.constant 0 : i32
    %c0_i32_0 = arith.constant 0 : i32
    return %arg0, %c0_i32, %arg1 : i32, i32, i32
  }
  func.func @transform_1(%arg0: i32, %arg1: i32) -> (i32, i32, i32) {
    %c0_i32 = arith.constant 0 : i32
    %c0_i32_0 = arith.constant 0 : i32
    %c0_i32_1 = arith.constant 0 : i32
    %c0_i32_2 = arith.constant 0 : i32
    return %c0_i32, %c0_i32_0, %c0_i32_1 : i32, i32, i32
  }
  func.func @transform_2(%arg0: i32, %arg1: i32) -> (i32, i32) {
    %c0_i32 = arith.constant 0 : i32
    %c0_i32_0 = arith.constant 0 : i32
    %c0_i32_1 = arith.constant 0 : i32
    return %c0_i32, %c0_i32_0 : i32, i32
  }
  func.func @transform_3(%arg0: i32, %arg1: i32) -> (i32, i32) {
    %c0_i32 = arith.constant 0 : i32
    %c0_i32_0 = arith.constant 0 : i32
    %c0_i32_1 = arith.constant 0 : i32
    return %c0_i32, %c0_i32_0 : i32, i32
  }
  func.func @transform_4(%arg0: i32, %arg1: i32) -> (i32, i32) {
    %c0_i32 = arith.constant 0 : i32
    %c0_i32_0 = arith.constant 0 : i32
    %c0_i32_1 = arith.constant 0 : i32
    return %c0_i32, %c0_i32_0 : i32, i32
  }
  func.func @transform_5(%arg0: i32, %arg1: i32) -> (i32, i32) {
    %c0_i32 = arith.constant 0 : i32
    %c0_i32_0 = arith.constant 0 : i32
    %c0_i32_1 = arith.constant 0 : i32
    return %c0_i32, %c0_i32_0 : i32, i32
  }
  func.func @transform_6(%arg0: i32, %arg1: i32) -> (i32, i32) {
    %c0_i32 = arith.constant 0 : i32
    %c0_i32_0 = arith.constant 0 : i32
    %c0_i32_1 = arith.constant 0 : i32
    return %c0_i32, %c0_i32_0 : i32, i32
  }
  func.func @transform_7(%arg0: i32, %arg1: i32) -> (i32, i32) {
    %c0_i32 = arith.constant 0 : i32
    %c0_i32_0 = arith.constant 0 : i32
    %c0_i32_1 = arith.constant 0 : i32
    return %c0_i32, %c0_i32_0 : i32, i32
  }
  func.func @transform_8(%arg0: i32, %arg1: i32) -> (i32, i32, i32) {
    %c0_i32 = arith.constant 0 : i32
    %c0_i32_0 = arith.constant 0 : i32
    return %arg0, %c0_i32, %arg1 : i32, i32, i32
  }
}

</mosaic_0001>

<llo_original>
// kernel: tpu_custom_call.1
$region0: #{tpu_custom_call.1}
  #allocation0 [shape = 'u32[]', space=smem, size = 0x4, offset = 0x4, fixed_abs, tag = 'smem constant byte address 0x4 - core index']
  #allocation1 [shape = 'u32[144,128]{1,0:T(1,128)}', space=vmem, size = 0x12000, scoped, tag = 'internal scratch']
  #allocation2 [shape = 'f32[12,128]{1,0:T(8,128)}', space=vmem, size = 0x2000, scoped, tag = 'scratch operand']
  %s0 = inlined_call_operand.vmem [shape: f32[2,4,128], index: 0, kind: input, shape index: {}]
  %s1 = inlined_call_operand.hbm [shape: bf16[3,128,128], index: 1, kind: input, shape index: {}]
  %s2 = inlined_call_operand.vmem [shape: bf16[8,12], index: 2, kind: input, shape index: {}]
  %s3 = inlined_call_operand.vmem [shape: f32[8,1], index: 3, kind: input, shape index: {}]
  %s4 = inlined_call_operand.vmem [shape: bf16[8,8], index: 4, kind: input, shape index: {}]
  %s5 = inlined_call_operand.vmem [shape: f32[8,1], index: 5, kind: input, shape index: {}]
  %s6 = inlined_call_operand.vmem [shape: bf16[8,4], index: 6, kind: input, shape index: {}]
  %s7 = inlined_call_operand.vmem [shape: f32[8,1], index: 7, kind: input, shape index: {}]
  %s8 = inlined_call_operand.hbm [shape: f32[2,8,128], index: 8, kind: output, shape index: {}]
  %s9 = sld [smem:[#allocation0]]
  $region69: #{tpu_custom_call.1} parent=0
    _
  %s11 = ssub.s32 1, %s9
  %s12 = scalar_select 0, %s11, %s9
  $region1: #{tpu_custom_call.1} parent=0
    #allocation3 [shape = 'u8[98304]{0}', space=vmem, size = 0x18000, scoped, tag = 'input window, operand 1, single buffered']
    #allocation4 [shape = 's32[2]{0}', space=sflag, size = 0x8, scoped, tag = 'scoped memory for tpu_custom_call.1']
    #allocation5 [shape = 's32[2]{0}', space=sflag, size = 0x8, scoped, tag = 'scoped memory for tpu_custom_call.1']
    #allocation6 [shape = 'u8[8192]{0}', space=vmem, size = 0x2000, scoped, tag = 'output window, operand 0']
    %13 = vsyncpa [#allocation4], 0
    %14 = vsyncpa [#allocation5], 0
    %s15 = scalar_lea.sflag [#allocation5], 1
    %16 = vsyncpa %s15, 0
    loop: start=0, step=1, limit=4
    $region2: #{tpu_custom_call.1} parent=1 // loop_pre_header
      _
    $region3: #{tpu_custom_call.1} parent=1 // loop_header
      %s18 = sphi 0, %s22
      %p19 = scmp.ge.s32.totalorder %s18, 4
      %s25 = sphi 0, %s37
      %s26 = sphi 0, %s33
      %s27 = sphi 0, %s25
      %s28 = sphi 0, %s26
      %s29 = sphi 0, %s27
      %s30 = sphi 0, %s28
      %s42 = sphi 0, %s44
      %s45 = sphi 0, %s42
      %s46 = sphi 0, %s45
      %s62 = sphi 0, %s46
      %s66 = sphi 0, %s66
      %s68 = sphi 0, %s66
      %s69 = sphi 0, %s68
      %s83 = sphi 0, %s69
      %s87 = sphi 0, %s87
      %s89 = sphi 0, %s87
      %s90 = sphi 0, %s89
      %s104 = sphi 0, %s90
      %s108 = sphi 0, %s108
      %s110 = sphi 0, %s108
      %s111 = sphi 0, %s110
      %s125 = sphi 0, %s111
      %s129 = sphi 0, %s129
      %s131 = sphi 0, %s129
      %s132 = sphi 0, %s131
      %s146 = sphi 0, %s132
      %s150 = sphi 0, %s150
      %s152 = sphi 0, %s150
      %s153 = sphi 0, %s152
      %s167 = sphi 0, %s153
      %s171 = sphi 0, %s171
      %s173 = sphi 0, %s171
      %s174 = sphi 0, %s173
      %s188 = sphi 0, %s174
      %s192 = sphi 0, %s192
      %s194 = sphi 0, %s192
      %s195 = sphi 0, %s194
      %s209 = sphi 0, %s195
      %s217 = sphi 0, %s219
      %s220 = sphi 0, %s217
      %s221 = sphi 0, %s220
      %s237 = sphi 0, %s221
    $region4: #{tpu_custom_call.1} parent=1 // loop_header_branch
      %21 = sbr.rel (%p19) target = $region8
    $region5: #{tpu_custom_call.1} parent=1 // loop_body
      %s23 = ssub.s32 %s18, 1
      %s24 = ssub.s32 %s18, 2
      %s31 = sadd.s32 1, %s26
      %p32 = scmp.ge.s32.totalorder %s31, 1
      %s33 = scalar_select %p32, 0, %s31
      %s34 = sadd.s32 1, %s25
      %s35 = scalar_select %p32, %s34, %s25
      %p36 = scmp.ge.s32.totalorder %s35, 2
      %s37 = scalar_select %p36, 0, %s35
      %s38 = ssub.s32 %s25, %s37
      %s39 = ssub.s32 %s26, %s33
      %s40 = sor.u32 %s38, %s39
      %p41 = scmp.eq.s32.totalorder %s40, 0
      %s43 = sadd.s32 %s42, 1
      %s44 = scalar_select %p41, %s42, %s43
      %p47 = pneg %p41
      %p48 = scmp.eq.s32.totalorder %s18, 1
      %p49 = por %p47, %p48
      %p50 = scmp.ne.s32.totalorder %s42, %s45
      %p51 = scmp.eq.s32.totalorder %s18, 0
      %p52 = por %p50, %p51
      %p53 = scmp.ne.s32.totalorder %s42, %s45
      %p54 = scmp.eq.s32.totalorder %s23, 1
      %p55 = por %p53, %p54
      %p56 = scmp.ne.s32.totalorder %s45, %s46
      %p57 = scmp.eq.s32.totalorder %s23, 0
      %p58 = por %p56, %p57
      %p59 = scmp.ne.s32.totalorder %s45, %s46
      %p60 = scmp.eq.s32.totalorder %s24, 1
      %p61 = por %p59, %p60
      %p63 = scmp.ne.s32.totalorder %s46, %s62
      %p64 = scmp.eq.s32.totalorder %s24, 0
      %p65 = por %p63, %p64
      %s67 = sadd.s32 %s66, 1
      %p70 = scmp.eq.s32.totalorder %s18, 1
      %p71 = scmp.ne.s32.totalorder %s66, %s68
      %p72 = scmp.eq.s32.totalorder %s18, 0
      %p73 = por %p71, %p72
      %p74 = scmp.ne.s32.totalorder %s66, %s68
      %p75 = scmp.eq.s32.totalorder %s23, 1
      %p76 = por %p74, %p75
      %p77 = scmp.ne.s32.totalorder %s68, %s69
      %p78 = scmp.eq.s32.totalorder %s23, 0
      %p79 = por %p77, %p78
      %p80 = scmp.ne.s32.totalorder %s68, %s69
      %p81 = scmp.eq.s32.totalorder %s24, 1
      %p82 = por %p80, %p81
      %p84 = scmp.ne.s32.totalorder %s69, %s83
      %p85 = scmp.eq.s32.totalorder %s24, 0
      %p86 = por %p84, %p85
      %s88 = sadd.s32 %s87, 1
      %p91 = scmp.eq.s32.totalorder %s18, 1
      %p92 = scmp.ne.s32.totalorder %s87, %s89
      %p93 = scmp.eq.s32.totalorder %s18, 0
      %p94 = por %p92, %p93
      %p95 = scmp.ne.s32.totalorder %s87, %s89
      %p96 = scmp.eq.s32.totalorder %s23, 1
      %p97 = por %p95, %p96
      %p98 = scmp.ne.s32.totalorder %s89, %s90
      %p99 = scmp.eq.s32.totalorder %s23, 0
      %p100 = por %p98, %p99
      %p101 = scmp.ne.s32.totalorder %s89, %s90
      %p102 = scmp.eq.s32.totalorder %s24, 1
      %p103 = por %p101, %p102
      %p105 = scmp.ne.s32.totalorder %s90, %s104
      %p106 = scmp.eq.s32.totalorder %s24, 0
      %p107 = por %p105, %p106
      %s109 = sadd.s32 %s108, 1
      %p112 = scmp.eq.s32.totalorder %s18, 1
      %p113 = scmp.ne.s32.totalorder %s108, %s110
      %p114 = scmp.eq.s32.totalorder %s18, 0
      %p115 = por %p113, %p114
      %p116 = scmp.ne.s32.totalorder %s108, %s110
      %p117 = scmp.eq.s32.totalorder %s23, 1
      %p118 = por %p116, %p117
      %p119 = scmp.ne.s32.totalorder %s110, %s111
      %p120 = scmp.eq.s32.totalorder %s23, 0
      %p121 = por %p119, %p120
      %p122 = scmp.ne.s32.totalorder %s110, %s111
      %p123 = scmp.eq.s32.totalorder %s24, 1
      %p124 = por %p122, %p123
      %p126 = scmp.ne.s32.totalorder %s111, %s125
      %p127 = scmp.eq.s32.totalorder %s24, 0
      %p128 = por %p126, %p127
      %s130 = sadd.s32 %s129, 1
      %p133 = scmp.eq.s32.totalorder %s18, 1
      %p134 = scmp.ne.s32.totalorder %s129, %s131
      %p135 = scmp.eq.s32.totalorder %s18, 0
      %p136 = por %p134, %p135
      %p137 = scmp.ne.s32.totalorder %s129, %s131
      %p138 = scmp.eq.s32.totalorder %s23, 1
      %p139 = por %p137, %p138
      %p140 = scmp.ne.s32.totalorder %s131, %s132
      %p141 = scmp.eq.s32.totalorder %s23, 0
      %p142 = por %p140, %p141
      %p143 = scmp.ne.s32.totalorder %s131, %s132
      %p144 = scmp.eq.s32.totalorder %s24, 1
      %p145 = por %p143, %p144
      %p147 = scmp.ne.s32.totalorder %s132, %s146
      %p148 = scmp.eq.s32.totalorder %s24, 0
      %p149 = por %p147, %p148
      %s151 = sadd.s32 %s150, 1
      %p154 = scmp.eq.s32.totalorder %s18, 1
      %p155 = scmp.ne.s32.totalorder %s150, %s152
      %p156 = scmp.eq.s32.totalorder %s18, 0
      %p157 = por %p155, %p156
      %p158 = scmp.ne.s32.totalorder %s150, %s152
      %p159 = scmp.eq.s32.totalorder %s23, 1
      %p160 = por %p158, %p159
      %p161 = scmp.ne.s32.totalorder %s152, %s153
      %p162 = scmp.eq.s32.totalorder %s23, 0
      %p163 = por %p161, %p162
      %p164 = scmp.ne.s32.totalorder %s152, %s153
      %p165 = scmp.eq.s32.totalorder %s24, 1
      %p166 = por %p164, %p165
      %p168 = scmp.ne.s32.totalorder %s153, %s167
      %p169 = scmp.eq.s32.totalorder %s24, 0
      %p170 = por %p168, %p169
      %s172 = sadd.s32 %s171, 1
      %p175 = scmp.eq.s32.totalorder %s18, 1
      %p176 = scmp.ne.s32.totalorder %s171, %s173
      %p177 = scmp.eq.s32.totalorder %s18, 0
      %p178 = por %p176, %p177
      %p179 = scmp.ne.s32.totalorder %s171, %s173
      %p180 = scmp.eq.s32.totalorder %s23, 1
      %p181 = por %p179, %p180
      %p182 = scmp.ne.s32.totalorder %s173, %s174
      %p183 = scmp.eq.s32.totalorder %s23, 0
      %p184 = por %p182, %p183
      %p185 = scmp.ne.s32.totalorder %s173, %s174
      %p186 = scmp.eq.s32.totalorder %s24, 1
      %p187 = por %p185, %p186
      %p189 = scmp.ne.s32.totalorder %s174, %s188
      %p190 = scmp.eq.s32.totalorder %s24, 0
      %p191 = por %p189, %p190
      %s193 = sadd.s32 %s192, 1
      %p196 = scmp.eq.s32.totalorder %s18, 1
      %p197 = scmp.ne.s32.totalorder %s192, %s194
      %p198 = scmp.eq.s32.totalorder %s18, 0
      %p199 = por %p197, %p198
      %p200 = scmp.ne.s32.totalorder %s192, %s194
      %p201 = scmp.eq.s32.totalorder %s23, 1
      %p202 = por %p200, %p201
      %p203 = scmp.ne.s32.totalorder %s194, %s195
      %p204 = scmp.eq.s32.totalorder %s23, 0
      %p205 = por %p203, %p204
      %p206 = scmp.ne.s32.totalorder %s194, %s195
      %p207 = scmp.eq.s32.totalorder %s24, 1
      %p208 = por %p206, %p207
      %p210 = scmp.ne.s32.totalorder %s195, %s209
      %p211 = scmp.eq.s32.totalorder %s24, 0
      %p212 = por %p210, %p211
      %s213 = ssub.s32 %s25, %s37
      %s214 = ssub.s32 %s26, %s33
      %s215 = sor.u32 %s213, %s214
      %p216 = scmp.eq.s32.totalorder %s215, 0
      %s218 = sadd.s32 %s217, 1
      %s219 = scalar_select %p216, %s217, %s218
      %p222 = pneg %p216
      %p223 = scmp.eq.s32.totalorder %s18, 1
      %p224 = por %p222, %p223
      %p225 = scmp.ne.s32.totalorder %s217, %s220
      %p226 = scmp.eq.s32.totalorder %s18, 0
      %p227 = por %p225, %p226
      %p228 = scmp.ne.s32.totalorder %s217, %s220
      %p229 = scmp.eq.s32.totalorder %s23, 1
      %p230 = por %p228, %p229
      %p231 = scmp.ne.s32.totalorder %s220, %s221
      %p232 = scmp.eq.s32.totalorder %s23, 0
      %p233 = por %p231, %p232
      %p234 = scmp.ne.s32.totalorder %s220, %s221
      %p235 = scmp.eq.s32.totalorder %s24, 1
      %p236 = por %p234, %p235
      %p238 = scmp.ne.s32.totalorder %s221, %s237
      %p239 = scmp.eq.s32.totalorder %s24, 0
      %p240 = por %p238, %p239
      %p241 = scmp.le.s32.totalorder 1, %s18
      %p242 = scmp.lt.s32.totalorder %s18, 3
      %p243 = pnand %p241, %p242
      %p244 = pneg %p243
      // Predicated region
      $region9: #{tpu_custom_call.1} parent=5 // pred_check
        _
      $region10: #{tpu_custom_call.1} parent=5 // pred_check_branch
        %246 = sbr.rel (%p243) target = $region12
      $region11: #{tpu_custom_call.1} parent=5 // pred_region
        %s247 = ssub.s32 %s18, 1
        // Predicated region
        $region13: #{tpu_custom_call.1} parent=11 // pred_check
          %p248 = pneg %p79
        $region14: #{tpu_custom_call.1} parent=11 // pred_check_branch
          %250 = sbr.rel (%p248) target = $region16
        $region15: #{tpu_custom_call.1} parent=11 // pred_region
          %s252 = ssub.s32 3072, 3072
          %253 = vsyncadd [#allocation4], %s252
          %s254 = sshll.u32 [#allocation3], 4
          %s255 = int_to_ptr.vmem [resolvable:$true] %s254
          %260 = dma.hbm_to_vmem [thread:$0]  %s1, 3072, %s255, [#allocation4], 64, 64, 4
        $region16: #{tpu_custom_call.1} parent=11 // pred_fallthru
          _
        // Predicated region
        $region17: #{tpu_custom_call.1} parent=11 // pred_check
          %p261 = pneg %p100
        $region18: #{tpu_custom_call.1} parent=11 // pred_check_branch
          %263 = sbr.rel (%p261) target = $region20
        $region19: #{tpu_custom_call.1} parent=11 // pred_region
          _
        $region20: #{tpu_custom_call.1} parent=11 // pred_fallthru
          _
        // Predicated region
        $region21: #{tpu_custom_call.1} parent=11 // pred_check
          %p264 = pneg %p121
        $region22: #{tpu_custom_call.1} parent=11 // pred_check_branch
          %266 = sbr.rel (%p264) target = $region24
        $region23: #{tpu_custom_call.1} parent=11 // pred_region
          _
        $region24: #{tpu_custom_call.1} parent=11 // pred_fallthru
          _
        // Predicated region
        $region25: #{tpu_custom_call.1} parent=11 // pred_check
          %p267 = pneg %p142
        $region26: #{tpu_custom_call.1} parent=11 // pred_check_branch
          %269 = sbr.rel (%p267) target = $region28
        $region27: #{tpu_custom_call.1} parent=11 // pred_region
          _
        $region28: #{tpu_custom_call.1} parent=11 // pred_fallthru
          _
        // Predicated region
        $region29: #{tpu_custom_call.1} parent=11 // pred_check
          %p270 = pneg %p163
        $region30: #{tpu_custom_call.1} parent=11 // pred_check_branch
          %272 = sbr.rel (%p270) target = $region32
        $region31: #{tpu_custom_call.1} parent=11 // pred_region
          _
        $region32: #{tpu_custom_call.1} parent=11 // pred_fallthru
          _
        // Predicated region
        $region33: #{tpu_custom_call.1} parent=11 // pred_check
          %p273 = pneg %p184
        $region34: #{tpu_custom_call.1} parent=11 // pred_check_branch
          %275 = sbr.rel (%p273) target = $region36
        $region35: #{tpu_custom_call.1} parent=11 // pred_region
          _
        $region36: #{tpu_custom_call.1} parent=11 // pred_fallthru
          _
        // Predicated region
        $region37: #{tpu_custom_call.1} parent=11 // pred_check
          %p276 = pneg %p205
        $region38: #{tpu_custom_call.1} parent=11 // pred_check_branch
          %278 = sbr.rel (%p276) target = $region40
        $region39: #{tpu_custom_call.1} parent=11 // pred_region
          _
        $region40: #{tpu_custom_call.1} parent=11 // pred_fallthru
          _
      $region12: #{tpu_custom_call.1} parent=5 // pred_fallthru
        _
      %p279 = scmp.lt.s32.totalorder %s18, 2
      // Predicated region
      $region41: #{tpu_custom_call.1} parent=5 // pred_check
        %p280 = pneg %p279
      $region42: #{tpu_custom_call.1} parent=5 // pred_check_branch
        %282 = sbr.rel (%p280) target = $region44
      $region43: #{tpu_custom_call.1} parent=5 // pred_region
        // Predicated region
        $region45: #{tpu_custom_call.1} parent=43 // pred_check
          %p283 = pneg %p52
        $region46: #{tpu_custom_call.1} parent=43 // pred_check_branch
          %285 = sbr.rel (%p283) target = $region48
        $region47: #{tpu_custom_call.1} parent=43 // pred_region
          %p286 = scmp.lt.s32.totalorder %s25, 1
          %s287 = scalar_select %p286, %s25, 1
          %p288 = scmp.lt.s32.totalorder %s26, 0
          %s289 = scalar_select %p288, %s26, 0
          %s290 = sadd.s32 %s289, %s287
          %s291 = smul.addr %s290, 4
          %s292 = scalar_lea.vmem %s0, %s291
        $region48: #{tpu_custom_call.1} parent=43 // pred_fallthru
          _
      $region44: #{tpu_custom_call.1} parent=5 // pred_fallthru
        _
      %p293 = scmp.le.s32.totalorder 1, %s18
      %p294 = scmp.lt.s32.totalorder %s18, 3
      %p295 = pnand %p293, %p294
      %p296 = pneg %p295
      // Predicated region
      $region49: #{tpu_custom_call.1} parent=5 // pred_check
        _
      $region50: #{tpu_custom_call.1} parent=5 // pred_check_branch
        %298 = sbr.rel (%p295) target = $region52
      $region51: #{tpu_custom_call.1} parent=5 // pred_region
        %s299 = ssub.s32 %s18, 1
        // Predicated region
        $region53: #{tpu_custom_call.1} parent=51 // pred_check
          %p300 = pneg %p79
        $region54: #{tpu_custom_call.1} parent=51 // pred_check_branch
          %302 = sbr.rel (%p300) target = $region56
        $region55: #{tpu_custom_call.1} parent=51 // pred_region
          %303 = dma.done [#allocation4], 3072
        $region56: #{tpu_custom_call.1} parent=51 // pred_fallthru
          _
        %p304 = scmp.lt.s32.totalorder %s27, 1
        %s305 = scalar_select %p304, %s27, 1
        %p306 = scmp.lt.s32.totalorder %s28, 0
        %s307 = scalar_select %p306, %s28, 0
        %s308 = sadd.s32 %s307, %s305
        %s309 = smul.addr %s308, 4
        %s310 = scalar_lea.vmem %s0, %s309
        %p311 = pneg %p58
        %p312 = pneg %p55
        %p313 = pneg %p79
        %p314 = pneg %p76
        %p315 = pneg %p100
        %p316 = pneg %p97
        %p317 = pneg %p121
        %p318 = pneg %p118
        %p319 = pneg %p142
        %p320 = pneg %p139
        %p321 = pneg %p163
        %p322 = pneg %p160
        %p323 = pneg %p184
        %p324 = pneg %p181
        %p325 = pneg %p205
        %p326 = pneg %p202
        %p327 = pneg %p233
        %p328 = pneg %p230
        %s329 = sand.u32 %s220, 1
        %s330 = scalar_lea.sflag [#allocation5], %s329
        %s331 = sand.u32 %s220, 1
        %s332 = smul.addr %s331, 8
        %s333 = scalar_lea.vmem [#allocation6], %s332
        %p334 = scmp.lt.s32.totalorder %s27, 1
        %s335 = scalar_select %p334, %s27, 1
        %p336 = scmp.lt.s32.totalorder %s28, 0
        %s337 = scalar_select %p336, %s28, 0
        %s338 = sadd.s32 %s337, %s335
        %s339 = smul.addr %s338, 4
        %s340 = scalar_lea.vmem %s0, %s339
        %v342 = vld [vmem:[%s340] sm:$0xf]
        %v343 = vpack.c.bf16 %v342, %v342
        %v344 = vld [vmem:[#allocation3] sm:$0xf]
        %v345 = vld [vmem:[#allocation3 + $0x4] sm:$0xf]
        %v346 = vld [vmem:[#allocation3 + $0x8] sm:$0xf]
        %v347 = vld [vmem:[#allocation3 + $0xc] sm:$0xf]
        %v348 = vld [vmem:[#allocation3 + $0x10] sm:$0xf]
        %v349 = vld [vmem:[#allocation3 + $0x14] sm:$0xf]
        %v350 = vld [vmem:[#allocation3 + $0x18] sm:$0xf]
        %v351 = vld [vmem:[#allocation3 + $0x1c] sm:$0xf]
        %v352 = vld [vmem:[#allocation3 + $0x20] sm:$0xf]
        %v353 = vld [vmem:[#allocation3 + $0x24] sm:$0xf]
        %v354 = vld [vmem:[#allocation3 + $0x28] sm:$0xf]
        %v355 = vld [vmem:[#allocation3 + $0x2c] sm:$0xf]
        %v356 = vld [vmem:[#allocation3 + $0x30] sm:$0xf]
        %v357 = vld [vmem:[#allocation3 + $0x34] sm:$0xf]
        %v358 = vld [vmem:[#allocation3 + $0x38] sm:$0xf]
        %v359 = vld [vmem:[#allocation3 + $0x3c] sm:$0xf]
        %v376 = vunpack.c.l.b16 %v344
        %v377 = vunpack.c.l.b16 %v345
        %v378 = vunpack.c.l.b16 %v346
        %v379 = vunpack.c.l.b16 %v347
        %v380 = vunpack.c.l.b16 %v348
        %v381 = vunpack.c.l.b16 %v349
        %v382 = vunpack.c.l.b16 %v350
        %v383 = vunpack.c.l.b16 %v351
        %v384 = vunpack.c.l.b16 %v352
        %v385 = vunpack.c.l.b16 %v353
        %v386 = vunpack.c.l.b16 %v354
        %v387 = vunpack.c.l.b16 %v355
        %v388 = vunpack.c.l.b16 %v356
        %v389 = vunpack.c.l.b16 %v357
        %v390 = vunpack.c.l.b16 %v358
        %v391 = vunpack.c.l.b16 %v359
        %v392 = vpack.c.b16 %v377, %v376
        %v393 = vpack.c.b16 %v379, %v378
        %v394 = vpack.c.b16 %v381, %v380
        %v395 = vpack.c.b16 %v383, %v382
        %v396 = vpack.c.b16 %v385, %v384
        %v397 = vpack.c.b16 %v387, %v386
        %v398 = vpack.c.b16 %v389, %v388
        %v399 = vpack.c.b16 %v391, %v390
        %408 = vmatprep.subr.bf16.mxu0 0
        %409 = vmatpush1.bf16.msra.mxu0 %v392
        %410 = vmatprep.subr.bf16.mxu0 0
        %411 = vmatpush1.bf16.msra.mxu0 %v393
        %412 = vmatprep.subr.bf16.mxu0 0
        %413 = vmatpush1.bf16.msra.mxu0 %v394
        %414 = vmatprep.subr.bf16.mxu0 0
        %415 = vmatpush1.bf16.msra.mxu0 %v395
        %416 = vmatprep.subr.bf16.mxu0 0
        %417 = vmatpush1.bf16.msra.mxu0 %v396
        %418 = vmatprep.subr.bf16.mxu0 0
        %419 = vmatpush1.bf16.msra.mxu0 %v397
        %420 = vmatprep.subr.bf16.mxu0 0
        %421 = vmatpush1.bf16.msra.mxu0 %v398
        %422 = vmatprep.subr.bf16.mxu0 0
        %423 = vmatpush1.bf16.msra.mxu0 %v399
        %424 = vmatprep.subr.bf16.mxu0 0
        %425 = vmatpush1.bf16.msra.mxu0 0
        %426 = vmatprep.subr.bf16.mxu0 0
        %427 = vmatpush1.bf16.msra.mxu0 0
        %428 = vmatprep.subr.bf16.mxu0 0
        %429 = vmatpush1.bf16.msra.mxu0 0
        %430 = vmatprep.subr.bf16.mxu0 0
        %431 = vmatpush1.bf16.msra.mxu0 0
        %432 = vmatprep.subr.bf16.mxu0 0
        %433 = vmatpush1.bf16.msra.mxu0 0
        %434 = vmatprep.subr.bf16.mxu0 0
        %435 = vmatpush1.bf16.msra.mxu0 0
        %436 = vmatprep.subr.bf16.mxu0 0
        %437 = vmatpush1.bf16.msra.mxu0 0
        %438 = vmatprep.subr.bf16.mxu0 0
        %439 = vmatpush1.bf16.msra.mxu0 0
        %440 = vmatprep.mubr.bf16.mxu0 0
        %441 = vmatmul.mubr.bf16.gmra.mrb[0].mxu0 %v343
        %v442 = vpop.f32.mrb[0].mxu0
        %v443 = vadd.f32 0.0, %v442
        %v444 = vpop.f32.mrb[0].mxu0
        %v445 = vpop.f32.mrb[0].mxu0
        %v446 = vpop.f32.mrb[0].mxu0
        %447 = vdwg.mxu0
        %448 = vst [vmem:[#allocation2] sm:$0xf] %v443
        %s449 = scalar_lea.vmem [#allocation3], 64
        %v450 = vld [vmem:[%s449] sm:$0xf]
        %v451 = vld [vmem:[%s449 + $0x4] sm:$0xf]
        %v452 = vld [vmem:[%s449 + $0x8] sm:$0xf]
        %v453 = vld [vmem:[%s449 + $0xc] sm:$0xf]
        %v454 = vld [vmem:[%s449 + $0x10] sm:$0xf]
        %v455 = vld [vmem:[%s449 + $0x14] sm:$0xf]
        %v456 = vld [vmem:[%s449 + $0x18] sm:$0xf]
        %v457 = vld [vmem:[%s449 + $0x1c] sm:$0xf]
        %v458 = vld [vmem:[%s449 + $0x20] sm:$0xf]
        %v459 = vld [vmem:[%s449 + $0x24] sm:$0xf]
        %v460 = vld [vmem:[%s449 + $0x28] sm:$0xf]
        %v461 = vld [vmem:[%s449 + $0x2c] sm:$0xf]
        %v462 = vld [vmem:[%s449 + $0x30] sm:$0xf]
        %v463 = vld [vmem:[%s449 + $0x34] sm:$0xf]
        %v464 = vld [vmem:[%s449 + $0x38] sm:$0xf]
        %v465 = vld [vmem:[%s449 + $0x3c] sm:$0xf]
        %v482 = vunpack.c.l.b16 %v450
        %v483 = vunpack.c.l.b16 %v451
        %v484 = vunpack.c.l.b16 %v452
        %v485 = vunpack.c.l.b16 %v453
        %v486 = vunpack.c.l.b16 %v454
        %v487 = vunpack.c.l.b16 %v455
        %v488 = vunpack.c.l.b16 %v456
        %v489 = vunpack.c.l.b16 %v457
        %v490 = vunpack.c.l.b16 %v458
        %v491 = vunpack.c.l.b16 %v459
        %v492 = vunpack.c.l.b16 %v460
        %v493 = vunpack.c.l.b16 %v461
        %v494 = vunpack.c.l.b16 %v462
        %v495 = vunpack.c.l.b16 %v463
        %v496 = vunpack.c.l.b16 %v464
        %v497 = vunpack.c.l.b16 %v465
        %v498 = vpack.c.b16 %v483, %v482
        %v499 = vpack.c.b16 %v485, %v484
        %v500 = vpack.c.b16 %v487, %v486
        %v501 = vpack.c.b16 %v489, %v488
        %v502 = vpack.c.b16 %v491, %v490
        %v503 = vpack.c.b16 %v493, %v492
        %v504 = vpack.c.b16 %v495, %v494
        %v505 = vpack.c.b16 %v497, %v496
        %514 = vmatprep.subr.bf16.mxu0 0
        %515 = vmatpush1.bf16.msra.mxu0 %v498
        %516 = vmatprep.subr.bf16.mxu0 0
        %517 = vmatpush1.bf16.msra.mxu0 %v499
        %518 = vmatprep.subr.bf16.mxu0 0
        %519 = vmatpush1.bf16.msra.mxu0 %v500
        %520 = vmatprep.subr.bf16.mxu0 0
        %521 = vmatpush1.bf16.msra.mxu0 %v501
        %522 = vmatprep.subr.bf16.mxu0 0
        %523 = vmatpush1.bf16.msra.mxu0 %v502
        %524 = vmatprep.subr.bf16.mxu0 0
        %525 = vmatpush1.bf16.msra.mxu0 %v503
        %526 = vmatprep.subr.bf16.mxu0 0
        %527 = vmatpush1.bf16.msra.mxu0 %v504
        %528 = vmatprep.subr.bf16.mxu0 0
        %529 = vmatpush1.bf16.msra.mxu0 %v505
        %530 = vmatprep.subr.bf16.mxu0 0
        %531 = vmatpush1.bf16.msra.mxu0 0
        %532 = vmatprep.subr.bf16.mxu0 0
        %533 = vmatpush1.bf16.msra.mxu0 0
        %534 = vmatprep.subr.bf16.mxu0 0
        %535 = vmatpush1.bf16.msra.mxu0 0
        %536 = vmatprep.subr.bf16.mxu0 0
        %537 = vmatpush1.bf16.msra.mxu0 0
        %538 = vmatprep.subr.bf16.mxu0 0
        %539 = vmatpush1.bf16.msra.mxu0 0
        %540 = vmatprep.subr.bf16.mxu0 0
        %541 = vmatpush1.bf16.msra.mxu0 0
        %542 = vmatprep.subr.bf16.mxu0 0
        %543 = vmatpush1.bf16.msra.mxu0 0
        %544 = vmatprep.subr.bf16.mxu0 0
        %545 = vmatpush1.bf16.msra.mxu0 0
        %546 = vmatprep.mubr.bf16.mxu0 0
        %547 = vmatmul.mubr.bf16.gmra.mrb[0].mxu0 %v343
        %v548 = vpop.f32.mrb[0].mxu0
        %v549 = vadd.f32 0.0, %v548
        %v550 = vpop.f32.mrb[0].mxu0
        %v551 = vpop.f32.mrb[0].mxu0
        %v552 = vpop.f32.mrb[0].mxu0
        %553 = vdwg.mxu0
        %554 = vst [vmem:[#allocation2 + $0x4] sm:$0xf] %v549
        %s555 = scalar_lea.vmem [#allocation3], 128
        %v556 = vld [vmem:[%s555] sm:$0xf]
        %v557 = vld [vmem:[%s555 + $0x4] sm:$0xf]
        %v558 = vld [vmem:[%s555 + $0x8] sm:$0xf]
        %v559 = vld [vmem:[%s555 + $0xc] sm:$0xf]
        %v560 = vld [vmem:[%s555 + $0x10] sm:$0xf]
        %v561 = vld [vmem:[%s555 + $0x14] sm:$0xf]
        %v562 = vld [vmem:[%s555 + $0x18] sm:$0xf]
        %v563 = vld [vmem:[%s555 + $0x1c] sm:$0xf]
        %v564 = vld [vmem:[%s555 + $0x20] sm:$0xf]
        %v565 = vld [vmem:[%s555 + $0x24] sm:$0xf]
        %v566 = vld [vmem:[%s555 + $0x28] sm:$0xf]
        %v567 = vld [vmem:[%s555 + $0x2c] sm:$0xf]
        %v568 = vld [vmem:[%s555 + $0x30] sm:$0xf]
        %v569 = vld [vmem:[%s555 + $0x34] sm:$0xf]
        %v570 = vld [vmem:[%s555 + $0x38] sm:$0xf]
        %v571 = vld [vmem:[%s555 + $0x3c] sm:$0xf]
        %v588 = vunpack.c.l.b16 %v556
        %v589 = vunpack.c.l.b16 %v557
        %v590 = vunpack.c.l.b16 %v558
        %v591 = vunpack.c.l.b16 %v559
        %v592 = vunpack.c.l.b16 %v560
        %v593 = vunpack.c.l.b16 %v561
        %v594 = vunpack.c.l.b16 %v562
        %v595 = vunpack.c.l.b16 %v563
        %v596 = vunpack.c.l.b16 %v564
        %v597 = vunpack.c.l.b16 %v565
        %v598 = vunpack.c.l.b16 %v566
        %v599 = vunpack.c.l.b16 %v567
        %v600 = vunpack.c.l.b16 %v568
        %v601 = vunpack.c.l.b16 %v569
        %v602 = vunpack.c.l.b16 %v570
        %v603 = vunpack.c.l.b16 %v571
        %v604 = vpack.c.b16 %v589, %v588
        %v605 = vpack.c.b16 %v591, %v590
        %v606 = vpack.c.b16 %v593, %v592
        %v607 = vpack.c.b16 %v595, %v594
        %v608 = vpack.c.b16 %v597, %v596
        %v609 = vpack.c.b16 %v599, %v598
        %v610 = vpack.c.b16 %v601, %v600
        %v611 = vpack.c.b16 %v603, %v602
        %620 = vmatprep.subr.bf16.mxu0 0
        %621 = vmatpush1.bf16.msra.mxu0 %v604
        %622 = vmatprep.subr.bf16.mxu0 0
        %623 = vmatpush1.bf16.msra.mxu0 %v605
        %624 = vmatprep.subr.bf16.mxu0 0
        %625 = vmatpush1.bf16.msra.mxu0 %v606
        %626 = vmatprep.subr.bf16.mxu0 0
        %627 = vmatpush1.bf16.msra.mxu0 %v607
        %628 = vmatprep.subr.bf16.mxu0 0
        %629 = vmatpush1.bf16.msra.mxu0 %v608
        %630 = vmatprep.subr.bf16.mxu0 0
        %631 = vmatpush1.bf16.msra.mxu0 %v609
        %632 = vmatprep.subr.bf16.mxu0 0
        %633 = vmatpush1.bf16.msra.mxu0 %v610
        %634 = vmatprep.subr.bf16.mxu0 0
        %635 = vmatpush1.bf16.msra.mxu0 %v611
        %636 = vmatprep.subr.bf16.mxu0 0
        %637 = vmatpush1.bf16.msra.mxu0 0
        %638 = vmatprep.subr.bf16.mxu0 0
        %639 = vmatpush1.bf16.msra.mxu0 0
        %640 = vmatprep.subr.bf16.mxu0 0
        %641 = vmatpush1.bf16.msra.mxu0 0
        %642 = vmatprep.subr.bf16.mxu0 0
        %643 = vmatpush1.bf16.msra.mxu0 0
        %644 = vmatprep.subr.bf16.mxu0 0
        %645 = vmatpush1.bf16.msra.mxu0 0
        %646 = vmatprep.subr.bf16.mxu0 0
        %647 = vmatpush1.bf16.msra.mxu0 0
        %648 = vmatprep.subr.bf16.mxu0 0
        %649 = vmatpush1.bf16.msra.mxu0 0
        %650 = vmatprep.subr.bf16.mxu0 0
        %651 = vmatpush1.bf16.msra.mxu0 0
        %652 = vmatprep.mubr.bf16.mxu0 0
        %653 = vmatmul.mubr.bf16.gmra.mrb[0].mxu0 %v343
        %v654 = vpop.f32.mrb[0].mxu0
        %v655 = vadd.f32 0.0, %v654
        %v656 = vpop.f32.mrb[0].mxu0
        %v657 = vpop.f32.mrb[0].mxu0
        %v658 = vpop.f32.mrb[0].mxu0
        %659 = vdwg.mxu0
        %660 = vst [vmem:[#allocation2 + $0x8] sm:$0xf] %v655
        %v661 = vld [vmem:[#allocation2] sm:$0xff]
        %v662 = vld [vmem:[#allocation2 + $0x8] sm:$0xf]
        %v663 = vpack.c.bf16 %v662, %v661
        %v664 = vld [vmem:[%s2] sm:$0xf]
        %v665 = vld [vmem:[%s3] sm:$0xff]
        %667 = vset.pattern.permute.xlu0 0
        %668 = vperm.xlu0 %667, %v665
        %v669 = vpop.permute.xlu0 %668
        %vm671 = vcmask 97280
        %v673 = vsel %vm671, %v664, 0
        %vm675 = vcmask 1045504
        %v677 = vsel %vm675, %v663, 0
        %679 = vmatprep.subr.bf16.mxu0 0
        %680 = vmatpush1.bf16.msra.mxu0 %v677
        %681 = vmatprep.subr.bf16.mxu0 0
        %682 = vmatpush1.bf16.msra.mxu0 0
        %683 = vmatprep.subr.bf16.mxu0 0
        %684 = vmatpush1.bf16.msra.mxu0 0
        %685 = vmatprep.subr.bf16.mxu0 0
        %686 = vmatpush1.bf16.msra.mxu0 0
        %687 = vmatprep.subr.bf16.mxu0 0
        %688 = vmatpush1.bf16.msra.mxu0 0
        %689 = vmatprep.subr.bf16.mxu0 0
        %690 = vmatpush1.bf16.msra.mxu0 0
        %691 = vmatprep.subr.bf16.mxu0 0
        %692 = vmatpush1.bf16.msra.mxu0 0
        %693 = vmatprep.subr.bf16.mxu0 0
        %694 = vmatpush1.bf16.msra.mxu0 0
        %695 = vmatprep.subr.bf16.mxu0 0
        %696 = vmatpush1.bf16.msra.mxu0 0
        %697 = vmatprep.subr.bf16.mxu0 0
        %698 = vmatpush1.bf16.msra.mxu0 0
        %699 = vmatprep.subr.bf16.mxu0 0
        %700 = vmatpush1.bf16.msra.mxu0 0
        %701 = vmatprep.subr.bf16.mxu0 0
        %702 = vmatpush1.bf16.msra.mxu0 0
        %703 = vmatprep.subr.bf16.mxu0 0
        %704 = vmatpush1.bf16.msra.mxu0 0
        %705 = vmatprep.subr.bf16.mxu0 0
        %706 = vmatpush1.bf16.msra.mxu0 0
        %707 = vmatprep.subr.bf16.mxu0 0
        %708 = vmatpush1.bf16.msra.mxu0 0
        %709 = vmatprep.subr.bf16.mxu0 0
        %710 = vmatpush1.bf16.msra.mxu0 0
        %711 = vmatprep.mubr.bf16.mxu0 0
        %712 = vmatmul.mubr.bf16.gmra.mrb[0].mxu0 %v673
        %v713 = vpop.f32.mrb[0].mxu0
        %v714 = vadd.f32 %v669, %v713
        %v715 = vpop.f32.mrb[0].mxu0
        %v716 = vpop.f32.mrb[0].mxu0
        %v717 = vpop.f32.mrb[0].mxu0
        %718 = vdwg.mxu0
        %v719 = vmax.f32 %v714, 0.0
        %v720 = vld [vmem:[%s4] sm:$0xf]
        %v721 = vpack.c.bf16 %v719, %v719
        %v722 = vld [vmem:[%s5] sm:$0xff]
        %724 = vset.pattern.permute.xlu0 0
        %725 = vperm.xlu0 %724, %v722
        %v726 = vpop.permute.xlu0 %725
        %vm728 = vcmask 64512
        %v730 = vsel %vm728, %v720, 0
        %vm732 = vcmask 1043456
        %v734 = vsel %vm732, %v721, 0
        %736 = vmatprep.subr.bf16.mxu0 0
        %737 = vmatpush1.bf16.msra.mxu0 %v734
        %738 = vmatprep.subr.bf16.mxu0 0
        %739 = vmatpush1.bf16.msra.mxu0 0
        %740 = vmatprep.subr.bf16.mxu0 0
        %741 = vmatpush1.bf16.msra.mxu0 0
        %742 = vmatprep.subr.bf16.mxu0 0
        %743 = vmatpush1.bf16.msra.mxu0 0
        %744 = vmatprep.subr.bf16.mxu0 0
        %745 = vmatpush1.bf16.msra.mxu0 0
        %746 = vmatprep.subr.bf16.mxu0 0
        %747 = vmatpush1.bf16.msra.mxu0 0
        %748 = vmatprep.subr.bf16.mxu0 0
        %749 = vmatpush1.bf16.msra.mxu0 0
        %750 = vmatprep.subr.bf16.mxu0 0
        %751 = vmatpush1.bf16.msra.mxu0 0
        %752 = vmatprep.subr.bf16.mxu0 0
        %753 = vmatpush1.bf16.msra.mxu0 0
        %754 = vmatprep.subr.bf16.mxu0 0
        %755 = vmatpush1.bf16.msra.mxu0 0
        %756 = vmatprep.subr.bf16.mxu0 0
        %757 = vmatpush1.bf16.msra.mxu0 0
        %758 = vmatprep.subr.bf16.mxu0 0
        %759 = vmatpush1.bf16.msra.mxu0 0
        %760 = vmatprep.subr.bf16.mxu0 0
        %761 = vmatpush1.bf16.msra.mxu0 0
        %762 = vmatprep.subr.bf16.mxu0 0
        %763 = vmatpush1.bf16.msra.mxu0 0
        %764 = vmatprep.subr.bf16.mxu0 0
        %765 = vmatpush1.bf16.msra.mxu0 0
        %766 = vmatprep.subr.bf16.mxu0 0
        %767 = vmatpush1.bf16.msra.mxu0 0
        %768 = vmatprep.mubr.bf16.mxu0 0
        %769 = vmatmul.mubr.bf16.gmra.mrb[0].mxu0 %v730
        %v770 = vpop.f32.mrb[0].mxu0
        %v771 = vadd.f32 %v726, %v770
        %v772 = vpop.f32.mrb[0].mxu0
        %v773 = vpop.f32.mrb[0].mxu0
        %v774 = vpop.f32.mrb[0].mxu0
        %775 = vdwg.mxu0
        %v776 = vmax.f32 %v771, 0.0
        %v777 = vld [vmem:[%s6] sm:$0xf]
        %v778 = vld [vmem:[%s7] sm:$0xff]
        %780 = vset.pattern.permute.xlu0 0
        %781 = vperm.xlu0 %780, %v778
        %v782 = vpop.permute.xlu0 %781
        %vm784 = vcmask 31744
        %v786 = vsel %vm784, %v777, 0
        %vm788 = vcmask 1041408
        %v790 = vsel %vm788, %v343, 0
        %792 = vmatprep.subr.bf16.mxu0 0
        %793 = vmatpush1.bf16.msra.mxu0 %v790
        %794 = vmatprep.subr.bf16.mxu0 0
        %795 = vmatpush1.bf16.msra.mxu0 0
        %796 = vmatprep.subr.bf16.mxu0 0
        %797 = vmatpush1.bf16.msra.mxu0 0
        %798 = vmatprep.subr.bf16.mxu0 0
        %799 = vmatpush1.bf16.msra.mxu0 0
        %800 = vmatprep.subr.bf16.mxu0 0
        %801 = vmatpush1.bf16.msra.mxu0 0
        %802 = vmatprep.subr.bf16.mxu0 0
        %803 = vmatpush1.bf16.msra.mxu0 0
        %804 = vmatprep.subr.bf16.mxu0 0
        %805 = vmatpush1.bf16.msra.mxu0 0
        %806 = vmatprep.subr.bf16.mxu0 0
        %807 = vmatpush1.bf16.msra.mxu0 0
        %808 = vmatprep.subr.bf16.mxu0 0
        %809 = vmatpush1.bf16.msra.mxu0 0
        %810 = vmatprep.subr.bf16.mxu0 0
        %811 = vmatpush1.bf16.msra.mxu0 0
        %812 = vmatprep.subr.bf16.mxu0 0
        %813 = vmatpush1.bf16.msra.mxu0 0
        %814 = vmatprep.subr.bf16.mxu0 0
        %815 = vmatpush1.bf16.msra.mxu0 0
        %816 = vmatprep.subr.bf16.mxu0 0
        %817 = vmatpush1.bf16.msra.mxu0 0
        %818 = vmatprep.subr.bf16.mxu0 0
        %819 = vmatpush1.bf16.msra.mxu0 0
        %820 = vmatprep.subr.bf16.mxu0 0
        %821 = vmatpush1.bf16.msra.mxu0 0
        %822 = vmatprep.subr.bf16.mxu0 0
        %823 = vmatpush1.bf16.msra.mxu0 0
        %824 = vmatprep.mubr.bf16.mxu0 0
        %825 = vmatmul.mubr.bf16.gmra.mrb[0].mxu0 %v786
        %v826 = vpop.f32.mrb[0].mxu0
        %v827 = vadd.f32 %v782, %v826
        %v828 = vpop.f32.mrb[0].mxu0
        %v829 = vpop.f32.mrb[0].mxu0
        %v830 = vpop.f32.mrb[0].mxu0
        %831 = vdwg.mxu0
        %v832 = vadd.f32 %v776, %v827
        %v833 = vmax.f32 %v832, 0.0
        %834 = vst [vmem:[%s333] sm:$0xff] %v833
        %s835 = sand.u32 %s220, 1
        %s836 = scalar_lea.sflag [#allocation5], %s835
        %s837 = sand.u32 %s220, 1
        %s838 = smul.addr %s837, 8
        %s839 = scalar_lea.vmem [#allocation6], %s838
        // Predicated region
        $region57: #{tpu_custom_call.1} parent=51 // pred_check
          %p840 = pneg %p230
        $region58: #{tpu_custom_call.1} parent=51 // pred_check_branch
          %842 = sbr.rel (%p840) target = $region60
        $region59: #{tpu_custom_call.1} parent=51 // pred_region
          %s844 = ssub.s32 128, 128
          %845 = vsyncadd %s836, %s844
          %s846 = sadd.s32 %s28, %s27
          %s847 = smul.addr %s846, 128
          %s848 = scalar_lea.hbm %s8, %s847
          %s850 = sshll.u32 %s839, 4
          %s851 = int_to_ptr.vmem [resolvable:$true] %s850
          %853 = dma.vmem_to_hbm [thread:$0]  %s851, 128, %s848, %s836
        $region60: #{tpu_custom_call.1} parent=51 // pred_fallthru
          _
      $region52: #{tpu_custom_call.1} parent=5 // pred_fallthru
        _
      %p854 = scmp.le.s32.totalorder 2, %s18
      // Predicated region
      $region61: #{tpu_custom_call.1} parent=5 // pred_check
        %p855 = pneg %p854
      $region62: #{tpu_custom_call.1} parent=5 // pred_check_branch
        %857 = sbr.rel (%p855) target = $region64
      $region63: #{tpu_custom_call.1} parent=5 // pred_region
        %s858 = ssub.s32 %s18, 2
        // Predicated region
        $region65: #{tpu_custom_call.1} parent=63 // pred_check
          %p859 = pneg %p236
        $region66: #{tpu_custom_call.1} parent=63 // pred_check_branch
          %861 = sbr.rel (%p859) target = $region68
        $region67: #{tpu_custom_call.1} parent=63 // pred_region
          %s862 = sand.u32 %s221, 1
          %s863 = scalar_lea.sflag [#allocation5], %s862
          %s864 = sand.u32 %s221, 1
          %s865 = smul.addr %s864, 8
          %s866 = scalar_lea.vmem [#allocation6], %s865
          %867 = dma.done %s863, 128
        $region68: #{tpu_custom_call.1} parent=63 // pred_fallthru
          _
      $region64: #{tpu_custom_call.1} parent=5 // pred_fallthru
        _
    $region6: #{tpu_custom_call.1} parent=1 // loop_footer
      %s22 = sadd.s32 1, %s18
    $region7: #{tpu_custom_call.1} parent=1 // loop_footer_branch
      %17 = sbr.rel target = $region3
    $region8: #{tpu_custom_call.1} parent=1 // loop_exit
      _
    %868 = vsyncpa [#allocation4], 1
    %s869 = scalar_lea.sflag [#allocation4], 1
    %870 = vsyncpa %s869, 1
    %871 = vsyncpa [#allocation5], 1
    %s872 = scalar_lea.sflag [#allocation5], 1
    %873 = vsyncpa %s872, 1

</llo_original>
